<compile_context>
chip_gen: v5e
topology: v5e:2x2
jax: 0.10.0
libtpu: 0.0.40
codegen_flags: <defaults>
</compile_context>

<pallas_src>
import numpy as np

import jax
import jax.numpy as jnp
from jax.experimental import pallas as pl
from jax.experimental.pallas import tpu as pltpu


class AbstractEncoderArgs:
    """Stand-in for the fairseq args namespace (the PyTorch module just stores it)."""
    pass


# ---- kernel ---------------------------------------------------------------

def _hbm_identity_kernel(x_hbm_ref, o_hbm_ref, sem):
    # The abstract encoder defines no transformation; forward == pass-through.
    # Single whole-array HBM->HBM DMA: no VMEM staging buffer, no vld/vst pass,
    # no grid / per-step overhead.
    # TODO(synk): concrete Encoder subclasses (sparse-voxel / volume encoders)
    # define real compute; nothing more can be translated from the abstract base.
    copy = pltpu.make_async_copy(x_hbm_ref, o_hbm_ref, sem)
    copy.start()
    copy.wait()


# ---- wrapper --------------------------------------------------------------

def _identity_copy(x):
    itemsize = jnp.dtype(x.dtype).itemsize
    nbytes = int(np.prod(x.shape)) * itemsize
    return pl.pallas_call(
        _hbm_identity_kernel,
        out_shape=jax.ShapeDtypeStruct(x.shape, x.dtype),
        in_specs=[pl.BlockSpec(memory_space=pl.ANY)],   # raw HBM ref, no auto-DMA/tiling
        out_specs=pl.BlockSpec(memory_space=pl.ANY),    # raw HBM ref, written by the DMA
        scratch_shapes=[pltpu.SemaphoreType.DMA(())],
        cost_estimate=pl.CostEstimate(
            flops=0,
            transcendentals=0,
            bytes_accessed=2 * nbytes,                  # read N + write N: bandwidth-only op
        ),
    )(x)


_identity_copy_jit = jax.jit(_identity_copy)


def abstract_encoder_forward(x):
    """Pallas 'forward' of the abstract encoder: identity over the input tensor."""
    return _identity_copy_jit(x)


class EncoderPallas:
    """JAX/Pallas mirror of the abstract Encoder backbone (no parameters)."""

    def __init__(self, args, strict_abstract=False):
        self.args = args           # the PyTorch __init__ registers no parameters
        self.strict_abstract = strict_abstract

    def forward(self, x):
        if self.strict_abstract:
            # Faithful to the PyTorch module's forward.
            raise NotImplementedError
        return abstract_encoder_forward(x)


if __name__ == "__main__":
    key = jax.random.PRNGKey(0)
    # Small NCHW input consistent with an image/feature backbone interface.
    x = jax.random.normal(key, (2, 4, 16, 16), dtype=jnp.float32)

    enc = EncoderPallas(AbstractEncoderArgs(), strict_abstract=False)
    y = enc.forward(x)
    y = jax.block_until_ready(y)

    assert y.shape == (2, 4, 16, 16) and y.dtype == jnp.float32
    assert np.allclose(np.asarray(y), np.asarray(x)), "identity pass-through mismatch"
    print("KERNEL_OK")
</pallas_src>

<mosaic_0001>
module attributes {stable_mosaic.version = 11 : i64} {
  func.func @_hbm_identity_kernel(%arg0: memref<2x4x16x16xf32, #tpu.memory_space<any>>, %arg1: memref<2x4x16x16xf32, #tpu.memory_space<any>>, %arg2: memref<!tpu.dma_semaphore, #tpu.memory_space<semaphore_mem>>) attributes {dimension_semantics = [], scalar_prefetch = 0 : i64, scratch_operands = 1 : i64, tpu.core_type = #tpu.core_type<tc>} {
    tpu.enqueue_dma source(%arg0 : memref<2x4x16x16xf32, #tpu.memory_space<any>>) target(%arg1 : memref<2x4x16x16xf32, #tpu.memory_space<any>>) target_semaphore(%arg2 : memref<!tpu.dma_semaphore, #tpu.memory_space<semaphore_mem>>)
    tpu.wait_dma2 semaphore(%arg2 : memref<!tpu.dma_semaphore, #tpu.memory_space<semaphore_mem>>) src(%arg0 : memref<2x4x16x16xf32, #tpu.memory_space<any>>) dst(%arg1 : memref<2x4x16x16xf32, #tpu.memory_space<any>>)
    return
  }
}

</mosaic_0001>

<llo_original>
// kernel: _identity_copy.1
$region0: #{_identity_copy.1}
  #allocation0 [shape = 'u32[]', space=smem, size = 0x4, offset = 0x4, fixed_abs, tag = 'smem constant byte address 0x4 - core index']
  #allocation1 [shape = 'u32[72,128]{1,0:T(1,128)}', space=vmem, size = 0x9000, scoped, tag = 'internal scratch']
  #allocation2 [shape = 's32[1]{0}', space=sflag, size = 0x4, scoped, tag = 'scratch operand']
  #allocation3 [shape = 's32[]', space=sflag, size = 0x4, offset = 0, fixed_abs, tag = 'sflag constant byte address 0x0 - dummy sync flag']
  #allocation4 [shape = 'u32[0]{0}', space=smem, size = 0, offset = 0, fixed_abs, tag = 'smem constant byte address 0x0 - null']
  %s0 = inlined_call_operand.hbm [shape: f32[2,4,16,16], index: 0, kind: input, shape index: {}]
  %s1 = inlined_call_operand.hbm [shape: f32[2,4,16,16], index: 1, kind: output, shape index: {}]
  %s2 = sld [smem:[#allocation0]]
  $region2: #{_identity_copy.1} parent=0
    _
  %s4 = ssub.s32 1, %s2
  %s5 = scalar_select 0, %s4, %s2
  %s7 = sshll.u32 1, 14
  %s8 = sxor.u32 4294967295, %s7
  %s10 = sshll.u32 %s0, 4
  %s11 = int_to_ptr.hbm [resolvable:$true] %s10
  %s12 = sshll.u32 %s1, 4
  %s13 = int_to_ptr.hbm [resolvable:$true] %s12
  %16 = dma.general %s11, 2048, %s13, [#allocation2], [#allocation3], [#allocation4], 0, 0
  %s17 = smul.u32 2, 4
  %s18 = smul.u32 %s17, 16
  %s19 = smul.u32 %s18, 1
  %s20 = sshll.u32 %s19, 4
  %21 = dma.done [#allocation2], %s20
  %22 = vsyncmov [#allocation2]
  %s23 = vpop.sfrf %22
  %p24 = scmp.eq.s32.totalorder %s23, 0
  %p25 = pneg %p24
  %27 = shalt.err (%p25)

</llo_original>
